<compile_context>
chip_gen: v7x
topology: tpu7x:2x2x1
jax: 0.10.0
libtpu: 0.0.40
codegen_flags: <defaults>
</compile_context>

<pallas_src>
import jax
import jax.numpy as jnp
from jax.experimental import pallas as pl
from jax.experimental.pallas import tpu as pltpu
import numpy as np


def _early_edge_std_kernel(x_ref, o_ref):
    # x_ref: (TB, C, H, W) VMEM tile; o_ref: (TB, 1, H, W)
    TB, C, H, W = x_ref.shape

    # 1) channel mean, accumulated in f32 (no explicit full f32 copy first).
    m = jnp.sum(x_ref[...], axis=1, dtype=jnp.float32) * (1.0 / C)   # (TB, H, W)

    # 2) unbiased 2x2 window std (ddof=1), separable difference form.
    #    Window at (i,j): a=m[i,j], b=m[i,j+1], c=m[i+1,j], d=m[i+1,j+1].
    top = m[:, : H - 1, :]
    bot = m[:, 1:, :]
    vsum = top + bot            # a+c per column (one sublane shift)
    vdif = top - bot            # a-c per column (shares the same two slabs)
    vs_l = vsum[:, :, : W - 1]
    vs_r = vsum[:, :, 1:]
    vd_l = vdif[:, :, : W - 1]
    vd_r = vdif[:, :, 1:]
    c1 = (vd_l + vd_r) * 0.5    # (a+b-c-d)/2
    c2 = (vs_l - vs_r) * 0.5    # (a-b+c-d)/2
    c3 = (vd_l - vd_r) * 0.5    # (a-b-c+d)/2
    var = (c1 * c1 + c2 * c2 + c3 * c3) * (1.0 / 3.0)
    edge = jnp.sqrt(var)        # (TB, H-1, W-1)

    # 3) nearest-neighbor resize (H-1, W-1) -> (H, W):
    #    src = max(dst - 1, 0)  ==  duplicate the first row and first column.
    edge = jnp.concatenate([edge[:, :1, :], edge], axis=1)   # (TB, H, W-1)
    edge = jnp.concatenate([edge[:, :, :1], edge], axis=2)   # (TB, H, W)

    o_ref[...] = edge[:, None, :, :].astype(o_ref.dtype)


def early_edge_std(x, *, vmem_block_budget_bytes=12 * 1024 * 1024):
    """x: (B, C, H, W) float -> (B, 1, H, W), same dtype as x."""
    B, C, H, W = x.shape
    if H < 2 or W < 2:
        raise ValueError("early_edge 'std' mode needs H >= 2 and W >= 2")

    itemsize = jnp.dtype(x.dtype).itemsize
    in_bytes = C * H * W * itemsize
    out_bytes = H * W * itemsize
    # double-buffered input/output blocks + ~6 f32 HxW in-kernel temporaries
    per_image = 2 * (in_bytes + out_bytes) + 6 * H * W * 4
    tb = max(1, min(B, vmem_block_budget_bytes // max(per_image, 1)))
    while B % tb != 0:   # largest divisor of B that fits the budget
        tb -= 1

    return pl.pallas_call(
        _early_edge_std_kernel,
        out_shape=jax.ShapeDtypeStruct((B, 1, H, W), x.dtype),
        grid_spec=pltpu.PrefetchScalarGridSpec(
            num_scalar_prefetch=0,
            grid=(B // tb,),
            in_specs=[pl.BlockSpec((tb, C, H, W), lambda b: (b, 0, 0, 0))],
            out_specs=pl.BlockSpec((tb, 1, H, W), lambda b: (b, 0, 0, 0)),
        ),
        compiler_params=pltpu.CompilerParams(
            dimension_semantics=("parallel",),
            vmem_limit_bytes=32 * 1024 * 1024,
        ),
    )(x)


def _reference_std(x):
    """Pure-JAX reference mirroring the PyTorch std path."""
    B, C, H, W = x.shape
    m = jnp.mean(x, axis=1)  # (B, H, W)
    a = m[:, : H - 1, : W - 1]
    b = m[:, : H - 1, 1:]
    c = m[:, 1:,      : W - 1]
    d = m[:, 1:,      1:]
    w = jnp.stack([a, b, c, d], axis=-1)
    edge = jnp.std(w, axis=-1, ddof=1)  # unbiased, like torch.std
    hs = (np.arange(H) * (H - 1)) // H
    ws = (np.arange(W) * (W - 1)) // W
    out = edge[:, hs, :][:, :, ws]
    return out[:, None, :, :]


if __name__ == "__main__":
    key = jax.random.PRNGKey(0)
    B, C, H, W = 2, 4, 16, 16
    x = jax.random.normal(key, (B, C, H, W), dtype=jnp.float32)

    out = early_edge_std(x)
    out = jax.block_until_ready(out)

    ref = _reference_std(x)
    assert out.shape == (B, 1, H, W), out.shape
    np.testing.assert_allclose(np.asarray(out), np.asarray(ref), rtol=1e-5, atol=1e-5)
    print("KERNEL_OK")
</pallas_src>

<mosaic_0001>
module attributes {stable_mosaic.version = 11 : i64} {
  func.func @_early_edge_std_kernel(%arg0: i32, %arg1: memref<2x4x16x16xf32, #tpu.memory_space<vmem>>, %arg2: memref<2x1x16x16xf32, #tpu.memory_space<vmem>>) attributes {dimension_semantics = [#tpu.dimension_semantics<parallel>], iteration_bounds = array<i64: 1>, scalar_prefetch = 0 : i64, scratch_operands = 0 : i64, tpu.core_type = #tpu.core_type<tc>, window_params = [{transform_indices = @transform_0, window_bounds = array<i64: 2, 4, 16, 16>}, {transform_indices = @transform_1, window_bounds = array<i64: 2, 1, 16, 16>}]} {
    %c0 = arith.constant 0 : index
    %c0_0 = arith.constant 0 : index
    %c0_1 = arith.constant 0 : index
    %c0_2 = arith.constant 0 : index
    %0 = vector.load %arg1[%c0, %c0_0, %c0_1, %c0_2] : memref<2x4x16x16xf32, #tpu.memory_space<vmem>>, vector<2x4x16x16xf32>
    %cst = arith.constant dense<0.000000e+00> : vector<2x16x16xf32>
    %1 = vector.multi_reduction <add>, %0, %cst [1] : vector<2x4x16x16xf32> to vector<2x16x16xf32>
    %cst_3 = arith.constant 2.500000e-01 : f32
    %2 = vector.broadcast %cst_3 : f32 to vector<2x16x16xf32>
    %3 = arith.mulf %1, %2 : vector<2x16x16xf32>
    %4 = vector.extract_strided_slice %3 {offsets = [0, 0, 0], sizes = [2, 15, 16], strides = [1, 1, 1]} : vector<2x16x16xf32> to vector<2x15x16xf32>
    %5 = vector.extract_strided_slice %3 {offsets = [0, 1, 0], sizes = [2, 15, 16], strides = [1, 1, 1]} : vector<2x16x16xf32> to vector<2x15x16xf32>
    %6 = arith.addf %4, %5 : vector<2x15x16xf32>
    %7 = arith.subf %4, %5 : vector<2x15x16xf32>
    %8 = vector.extract_strided_slice %6 {offsets = [0, 0, 0], sizes = [2, 15, 15], strides = [1, 1, 1]} : vector<2x15x16xf32> to vector<2x15x15xf32>
    %9 = vector.extract_strided_slice %6 {offsets = [0, 0, 1], sizes = [2, 15, 15], strides = [1, 1, 1]} : vector<2x15x16xf32> to vector<2x15x15xf32>
    %10 = vector.extract_strided_slice %7 {offsets = [0, 0, 0], sizes = [2, 15, 15], strides = [1, 1, 1]} : vector<2x15x16xf32> to vector<2x15x15xf32>
    %11 = vector.extract_strided_slice %7 {offsets = [0, 0, 1], sizes = [2, 15, 15], strides = [1, 1, 1]} : vector<2x15x16xf32> to vector<2x15x15xf32>
    %12 = arith.addf %10, %11 : vector<2x15x15xf32>
    %cst_4 = arith.constant 5.000000e-01 : f32
    %13 = vector.broadcast %cst_4 : f32 to vector<2x15x15xf32>
    %14 = arith.mulf %12, %13 : vector<2x15x15xf32>
    %15 = arith.subf %8, %9 : vector<2x15x15xf32>
    %cst_5 = arith.constant 5.000000e-01 : f32
    %16 = vector.broadcast %cst_5 : f32 to vector<2x15x15xf32>
    %17 = arith.mulf %15, %16 : vector<2x15x15xf32>
    %18 = arith.subf %10, %11 : vector<2x15x15xf32>
    %cst_6 = arith.constant 5.000000e-01 : f32
    %19 = vector.broadcast %cst_6 : f32 to vector<2x15x15xf32>
    %20 = arith.mulf %18, %19 : vector<2x15x15xf32>
    %21 = arith.mulf %14, %14 : vector<2x15x15xf32>
    %22 = arith.mulf %17, %17 : vector<2x15x15xf32>
    %23 = arith.addf %21, %22 : vector<2x15x15xf32>
    %24 = arith.mulf %20, %20 : vector<2x15x15xf32>
    %25 = arith.addf %23, %24 : vector<2x15x15xf32>
    %cst_7 = arith.constant 0.333333343 : f32
    %26 = vector.broadcast %cst_7 : f32 to vector<2x15x15xf32>
    %27 = arith.mulf %25, %26 : vector<2x15x15xf32>
    %28 = math.sqrt %27 : vector<2x15x15xf32>
    %29 = vector.extract_strided_slice %28 {offsets = [0, 0, 0], sizes = [2, 1, 15], strides = [1, 1, 1]} : vector<2x15x15xf32> to vector<2x1x15xf32>
    %30 = tpu.concatenate %29, %28 in 1 : vector<2x1x15xf32>, vector<2x15x15xf32> -> vector<2x16x15xf32>
    %31 = vector.extract_strided_slice %30 {offsets = [0, 0, 0], sizes = [2, 16, 1], strides = [1, 1, 1]} : vector<2x16x15xf32> to vector<2x16x1xf32>
    %32 = tpu.concatenate %31, %30 in 2 : vector<2x16x1xf32>, vector<2x16x15xf32> -> vector<2x16x16xf32>
    %33 = vector.shape_cast %32 : vector<2x16x16xf32> to vector<2x1x16x16xf32>
    %c0_8 = arith.constant 0 : index
    %c0_9 = arith.constant 0 : index
    %c0_10 = arith.constant 0 : index
    %c0_11 = arith.constant 0 : index
    %34 = vector.load %arg2[%c0_8, %c0_9, %c0_10, %c0_11] : memref<2x1x16x16xf32, #tpu.memory_space<vmem>>, vector<2x1x16x16xf32>
    tpu.vector_store %arg2[%c0_8, %c0_9, %c0_10, %c0_11], %33 {strides = array<i32>} : memref<2x1x16x16xf32, #tpu.memory_space<vmem>>, vector<2x1x16x16xf32>,
    return
  }
  func.func @transform_0(%arg0: i32) -> (i32, i32, i32, i32) {
    %c0_i32 = arith.constant 0 : i32
    %c0_i32_0 = arith.constant 0 : i32
    %c0_i32_1 = arith.constant 0 : i32
    %c0_i32_2 = arith.constant 0 : i32
    return %arg0, %c0_i32, %c0_i32_0, %c0_i32_1 : i32, i32, i32, i32
  }
  func.func @transform_1(%arg0: i32) -> (i32, i32, i32, i32) {
    %c0_i32 = arith.constant 0 : i32
    %c0_i32_0 = arith.constant 0 : i32
    %c0_i32_1 = arith.constant 0 : i32
    %c0_i32_2 = arith.constant 0 : i32
    return %arg0, %c0_i32, %c0_i32_0, %c0_i32_1 : i32, i32, i32, i32
  }
}

</mosaic_0001>

<llo_original>
// kernel: tpu_custom_call.1
$region0: #{tpu_custom_call.1}
  #allocation0 [shape = 'u32[]', space=smem, size = 0x4, offset = 0x4, fixed_abs, tag = 'smem constant byte address 0x4 - core index']
  #allocation1 [shape = 'u32[144,128]{1,0:T(1,128)}', space=vmem, size = 0x12000, scoped, tag = 'internal scratch']
  %s0 = inlined_call_operand.hbm [shape: f32[2,4,16,16], index: 0, kind: input, shape index: {}]
  %s1 = inlined_call_operand.hbm [shape: f32[2,1,16,16], index: 1, kind: output, shape index: {}]
  %s2 = sld [smem:[#allocation0]]
  $region18: #{tpu_custom_call.1} parent=0
    _
  %s4 = ssub.s32 1, %s2
  %s5 = scalar_select 0, %s4, %s2
  $region1: #{tpu_custom_call.1} parent=0
    #allocation2 [shape = 'u8[65536]{0}', space=vmem, size = 0x10000, scoped, tag = 'input window, operand 0, single buffered']
    #allocation3 [shape = 's32[1]{0}', space=sflag, size = 0x4, scoped, tag = 'scoped memory for tpu_custom_call.1']
    #allocation4 [shape = 's32[1]{0}', space=sflag, size = 0x4, scoped, tag = 'scoped memory for tpu_custom_call.1']
    #allocation5 [shape = 'u8[16384]{0}', space=vmem, size = 0x4000, scoped, tag = 'output window, operand 0, single buffered']
    %6 = vsyncpa [#allocation3], 0
    %7 = vsyncpa [#allocation4], 0
    // Predicated region
    $region2: #{tpu_custom_call.1} parent=1 // pred_check
      _
    $region3: #{tpu_custom_call.1} parent=1 // pred_check_branch
      %9 = sbr.rel (0) target = $region5
    $region4: #{tpu_custom_call.1} parent=1 // pred_region
      %s11 = ssub.s32 2048, 2048
      %12 = vsyncadd [#allocation3], %s11
      %s13 = sshll.u32 [#allocation2], 4
      %s14 = int_to_ptr.vmem [resolvable:$true] %s13
      %19 = dma.hbm_to_vmem [thread:$0]  %s0, 2048, %s14, [#allocation3], 128, 128, 8
    $region5: #{tpu_custom_call.1} parent=1 // pred_fallthru
      _
    // Predicated region
    $region6: #{tpu_custom_call.1} parent=1 // pred_check
      _
    $region7: #{tpu_custom_call.1} parent=1 // pred_check_branch
      %21 = sbr.rel (0) target = $region9
    $region8: #{tpu_custom_call.1} parent=1 // pred_region
      %22 = dma.done [#allocation3], 2048
    $region9: #{tpu_custom_call.1} parent=1 // pred_fallthru
      _
    %v23 = vld [vmem:[#allocation2] sm:$0xff]
    %v24 = vld [vmem:[#allocation2 + $0x8] sm:$0xff]
    %v25 = vld [vmem:[#allocation2 + $0x10] sm:$0xff]
    %v26 = vld [vmem:[#allocation2 + $0x18] sm:$0xff]
    %v27 = vld [vmem:[#allocation2 + $0x20] sm:$0xff]
    %v28 = vld [vmem:[#allocation2 + $0x28] sm:$0xff]
    %v29 = vld [vmem:[#allocation2 + $0x30] sm:$0xff]
    %v30 = vld [vmem:[#allocation2 + $0x38] sm:$0xff]
    %v31 = vld [vmem:[#allocation2 + $0x40] sm:$0xff]
    %v32 = vld [vmem:[#allocation2 + $0x48] sm:$0xff]
    %v33 = vld [vmem:[#allocation2 + $0x50] sm:$0xff]
    %v34 = vld [vmem:[#allocation2 + $0x58] sm:$0xff]
    %v35 = vld [vmem:[#allocation2 + $0x60] sm:$0xff]
    %v36 = vld [vmem:[#allocation2 + $0x68] sm:$0xff]
    %v37 = vld [vmem:[#allocation2 + $0x70] sm:$0xff]
    %v38 = vld [vmem:[#allocation2 + $0x78] sm:$0xff]
    %vm39 = vcmask 130048
    %v40 = vsel %vm39, %v23, 0.0
    %v41 = vsel %vm39, %v25, 0.0
    %v42 = vadd.f32 %v40, %v41
    %v43 = vsel %vm39, %v27, 0.0
    %v44 = vadd.f32 %v42, %v43
    %v45 = vsel %vm39, %v29, 0.0
    %v46 = vadd.f32 %v44, %v45
    %v47 = vsel %vm39, %v24, 0.0
    %v48 = vsel %vm39, %v26, 0.0
    %v49 = vadd.f32 %v47, %v48
    %v50 = vsel %vm39, %v28, 0.0
    %v51 = vadd.f32 %v49, %v50
    %v52 = vsel %vm39, %v30, 0.0
    %v53 = vadd.f32 %v51, %v52
    %v54 = vsel %vm39, %v31, 0.0
    %v55 = vsel %vm39, %v33, 0.0
    %v56 = vadd.f32 %v54, %v55
    %v57 = vsel %vm39, %v35, 0.0
    %v58 = vadd.f32 %v56, %v57
    %v59 = vsel %vm39, %v37, 0.0
    %v60 = vadd.f32 %v58, %v59
    %v61 = vsel %vm39, %v32, 0.0
    %v62 = vsel %vm39, %v34, 0.0
    %v63 = vadd.f32 %v61, %v62
    %v64 = vsel %vm39, %v36, 0.0
    %v65 = vadd.f32 %v63, %v64
    %v66 = vsel %vm39, %v38, 0.0
    %v67 = vadd.f32 %v65, %v66
    %v68 = vmul.f32 %v46, 0.25
    %v69 = vmul.f32 %v53, 0.25
    %v70 = vmul.f32 %v60, 0.25
    %v71 = vmul.f32 %v67, 0.25
    %vm76 = vcmask 1046528
    %v77 = vrot.slane %v68, 1
    %v78 = vrot.slane %v69, 1
    %v79 = vsel %vm76, %v77, %v78
    %v80 = vrot.slane %v70, 1
    %v81 = vrot.slane %v71, 1
    %v82 = vsel %vm76, %v80, %v81
    %v87 = vadd.f32 %v68, %v79
    %v88 = vadd.f32 %v69, %v78
    %v89 = vadd.f32 %v70, %v82
    %v90 = vadd.f32 %v71, %v81
    %v91 = vsub.f32 %v68, %v79
    %v92 = vsub.f32 %v69, %v78
    %v93 = vsub.f32 %v70, %v82
    %v94 = vsub.f32 %v71, %v81
    %99 = vrot.lane.b32.xlu0 %v91, 127
    %v100 = vpop.permute.xlu0 %99
    %101 = vrot.lane.b32.xlu0 %v92, 127
    %v102 = vpop.permute.xlu0 %101
    %103 = vrot.lane.b32.xlu0 %v93, 127
    %v104 = vpop.permute.xlu0 %103
    %105 = vrot.lane.b32.xlu0 %v94, 127
    %v106 = vpop.permute.xlu0 %105
    %v111 = vadd.f32 %v91, %v100
    %v112 = vadd.f32 %v92, %v102
    %v113 = vadd.f32 %v93, %v104
    %v114 = vadd.f32 %v94, %v106
    %v115 = vmul.f32 %v111, 0.5
    %v116 = vmul.f32 %v112, 0.5
    %v117 = vmul.f32 %v113, 0.5
    %v118 = vmul.f32 %v114, 0.5
    %123 = vrot.lane.b32.xlu0 %v87, 127
    %v124 = vpop.permute.xlu0 %123
    %125 = vrot.lane.b32.xlu0 %v88, 127
    %v126 = vpop.permute.xlu0 %125
    %127 = vrot.lane.b32.xlu0 %v89, 127
    %v128 = vpop.permute.xlu0 %127
    %129 = vrot.lane.b32.xlu0 %v90, 127
    %v130 = vpop.permute.xlu0 %129
    %v135 = vsub.f32 %v87, %v124
    %v136 = vsub.f32 %v88, %v126
    %v137 = vsub.f32 %v89, %v128
    %v138 = vsub.f32 %v90, %v130
    %v139 = vmul.f32 %v135, 0.5
    %v140 = vmul.f32 %v136, 0.5
    %v141 = vmul.f32 %v137, 0.5
    %v142 = vmul.f32 %v138, 0.5
    %v143 = vsub.f32 %v91, %v100
    %v144 = vsub.f32 %v92, %v102
    %v145 = vsub.f32 %v93, %v104
    %v146 = vsub.f32 %v94, %v106
    %v147 = vmul.f32 %v143, 0.5
    %v148 = vmul.f32 %v144, 0.5
    %v149 = vmul.f32 %v145, 0.5
    %v150 = vmul.f32 %v146, 0.5
    %v151 = vmul.f32 %v115, %v115
    %v152 = vmul.f32 %v116, %v116
    %v153 = vmul.f32 %v117, %v117
    %v154 = vmul.f32 %v118, %v118
    %v155 = vmul.f32 %v139, %v139
    %v156 = vmul.f32 %v140, %v140
    %v157 = vmul.f32 %v141, %v141
    %v158 = vmul.f32 %v142, %v142
    %v159 = vadd.f32 %v151, %v155
    %v160 = vadd.f32 %v152, %v156
    %v161 = vadd.f32 %v153, %v157
    %v162 = vadd.f32 %v154, %v158
    %v163 = vmul.f32 %v147, %v147
    %v164 = vmul.f32 %v148, %v148
    %v165 = vmul.f32 %v149, %v149
    %v166 = vmul.f32 %v150, %v150
    %v167 = vadd.f32 %v159, %v163
    %v168 = vadd.f32 %v160, %v164
    %v169 = vadd.f32 %v161, %v165
    %v170 = vadd.f32 %v162, %v166
    %v171 = vmul.f32 %v167, 0.33333334
    %v172 = vmul.f32 %v168, 0.33333334
    %v173 = vmul.f32 %v169, 0.33333334
    %v174 = vmul.f32 %v170, 0.33333334
    %v175 = vrsqrt.pop %v171
    %v176 = vmul.f32 %v171, %v175
    %vm177 = vcmp.eq.f32.partialorder %v171, inf
    %v178 = vsel %vm177, %v171, %v176
    %vm179 = vcmp.eq.f32.partialorder %v171, 0.0
    %v180 = vand.u32 %v171, 2147483648
    %v181 = vsel %vm179, %v180, %v178
    %v182 = vrsqrt.pop %v172
    %v183 = vmul.f32 %v172, %v182
    %vm184 = vcmp.eq.f32.partialorder %v172, inf
    %v185 = vsel %vm184, %v172, %v183
    %vm186 = vcmp.eq.f32.partialorder %v172, 0.0
    %v187 = vand.u32 %v172, 2147483648
    %v188 = vsel %vm186, %v187, %v185
    %v189 = vrsqrt.pop %v173
    %v190 = vmul.f32 %v173, %v189
    %vm191 = vcmp.eq.f32.partialorder %v173, inf
    %v192 = vsel %vm191, %v173, %v190
    %vm193 = vcmp.eq.f32.partialorder %v173, 0.0
    %v194 = vand.u32 %v173, 2147483648
    %v195 = vsel %vm193, %v194, %v192
    %v196 = vrsqrt.pop %v174
    %v197 = vmul.f32 %v174, %v196
    %vm198 = vcmp.eq.f32.partialorder %v174, inf
    %v199 = vsel %vm198, %v174, %v197
    %vm200 = vcmp.eq.f32.partialorder %v174, 0.0
    %v201 = vand.u32 %v174, 2147483648
    %v202 = vsel %vm200, %v201, %v199
    %vm207 = vcmask 1040384
    %v208 = vrot.slane %v181, 7
    %v209 = vrot.slane %v188, 7
    %v210 = vsel %vm207, %v208, %v209
    %v211 = vrot.slane %v195, 7
    %v212 = vrot.slane %v202, 7
    %v213 = vsel %vm207, %v211, %v212
    %v218 = vsel %vm207, %v181, %v208
    %v219 = vsel %vm207, %v195, %v211
    %222 = vrot.lane.b32.xlu0 %v218, 1
    %v223 = vpop.permute.xlu0 %222
    %224 = vrot.lane.b32.xlu0 %v210, 1
    %v225 = vpop.permute.xlu0 %224
    %226 = vrot.lane.b32.xlu0 %v219, 1
    %v227 = vpop.permute.xlu0 %226
    %228 = vrot.lane.b32.xlu0 %v213, 1
    %v229 = vpop.permute.xlu0 %228
    %vm234 = vcmask 7168
    %v235 = vsel %vm234, %v218, %v223
    %v236 = vsel %vm234, %v210, %v225
    %v237 = vsel %vm234, %v219, %v227
    %v238 = vsel %vm234, %v213, %v229
    %239 = vst.msk [vmem:[#allocation5] sm:$0xff] %vm39, %v235
    %240 = vst.msk [vmem:[#allocation5 + $0x8] sm:$0xff] %vm39, %v236
    %241 = vst.msk [vmem:[#allocation5 + $0x10] sm:$0xff] %vm39, %v237
    %242 = vst.msk [vmem:[#allocation5 + $0x18] sm:$0xff] %vm39, %v238
    // Predicated region
    $region10: #{tpu_custom_call.1} parent=1 // pred_check
      _
    $region11: #{tpu_custom_call.1} parent=1 // pred_check_branch
      %244 = sbr.rel (0) target = $region13
    $region12: #{tpu_custom_call.1} parent=1 // pred_region
      %s246 = ssub.s32 512, 512
      %247 = vsyncadd [#allocation4], %s246
      %s248 = sshll.u32 [#allocation5], 4
      %s249 = int_to_ptr.vmem [resolvable:$true] %s248
      %254 = dma.vmem_to_hbm [thread:$0]  %s249, 512, %s1, [#allocation4], 128, 128, 8
    $region13: #{tpu_custom_call.1} parent=1 // pred_fallthru
      _
    // Predicated region
    $region14: #{tpu_custom_call.1} parent=1 // pred_check
      _
    $region15: #{tpu_custom_call.1} parent=1 // pred_check_branch
      %256 = sbr.rel (0) target = $region17
    $region16: #{tpu_custom_call.1} parent=1 // pred_region
      %257 = dma.done [#allocation4], 512
    $region17: #{tpu_custom_call.1} parent=1 // pred_fallthru
      _
    %258 = vsyncpa [#allocation3], 1
    %259 = vsyncpa [#allocation4], 1

</llo_original>
